<compile_context>
chip_gen: v7x
topology: tpu7x:2x2x1
jax: 0.10.0
libtpu: 0.0.40
codegen_flags: <defaults>
</compile_context>

<pallas_src>
import functools

import jax
import jax.numpy as jnp
from jax.experimental import pallas as pl
from jax.experimental.pallas import tpu as pltpu


def _round_up(x: int, m: int) -> int:
    return ((x + m - 1) // m) * m


def _pick_tile(padded_dim: int, want: int, unit: int) -> int:
    """Largest multiple of `unit` that divides `padded_dim` and is <= `want`.

    `padded_dim` must itself be a multiple of `unit`.
    """
    if padded_dim <= want:
        return padded_dim
    d = padded_dim // unit
    for cand in range(want // unit, 0, -1):
        if d % cand == 0:
            return cand * unit
    return unit


def _linear_block_kernel(x_ref, w_ref, scale_ref, shift_ref, o_ref, acc_ref,
                         *, activation: str, negative_slope: float):
    k = pl.program_id(2)

    @pl.when(k == 0)
    def _():
        acc_ref[...] = jnp.zeros_like(acc_ref)

    # bf16 x bf16 -> f32 accumulation on the MXU.
    acc_ref[...] += jnp.dot(x_ref[...], w_ref[...],
                            preferred_element_type=jnp.float32)

    @pl.when(k == pl.num_programs(2) - 1)
    def _():
        # Per-column BatchNorm scale (f32) + folded (bias + BN) shift (f32).
        z = acc_ref[...] * scale_ref[...] + shift_ref[...]
        if activation == "relu":
            z = jnp.maximum(z, 0.0)
        elif activation == "leaky_relu":
            z = jnp.where(z >= 0.0, z, z * negative_slope)
        elif activation == "tanh":
            z = jnp.tanh(z)
        # "none": identity
        o_ref[...] = z.astype(o_ref.dtype)


def prepare_linear_block_params(weight, bias, gamma, beta, running_mean,
                                running_var, *, eps=1e-5):
    """One-time parameter folding + padding (compute ONCE, reuse every call).

        BN1d_eval(x @ W^T + b) == (x @ W) * scale + shift

    Returns (w_p, scale_p, shift_p, out_features):
      w_p:     (K_pad, N_pad)  bf16, lane-aligned (multiples of 128), UNscaled
      scale_p: (1, N_pad)      f32 per-column BN scale (gamma / sqrt(var+eps))
      shift_p: (1, N_pad)      f32 per-column shift (beta + (b - mean)*scale)

    Keeping the BN scale out of the bf16 weight preserves mantissa for columns
    with large gamma/inv_std. Padding columns of scale/shift are zero so padded
    outputs are exactly act(0) = 0 for all supported activations.
    """
    out_features, in_features = weight.shape
    inv_std = 1.0 / jnp.sqrt(running_var.astype(jnp.float32) + eps)
    scale = gamma.astype(jnp.float32) * inv_std                          # (out,)
    shift = (beta.astype(jnp.float32)
             + (bias.astype(jnp.float32) - running_mean.astype(jnp.float32))
             * scale)                                                    # (out,)

    k_pad = _round_up(in_features, 128)
    n_pad = _round_up(out_features, 128)
    w_p = jnp.zeros((k_pad, n_pad), jnp.bfloat16).at[
        :in_features, :out_features].set(weight.T.astype(jnp.bfloat16))
    scale_p = jnp.zeros((1, n_pad), jnp.float32).at[
        :, :out_features].set(scale.reshape(1, -1))
    shift_p = jnp.zeros((1, n_pad), jnp.float32).at[
        :, :out_features].set(shift.reshape(1, -1))
    return w_p, scale_p, shift_p, out_features


def linear_block_forward(x, w_p, scale_p, shift_p, out_features=None, *,
                         activation="relu", dropout=0.0, negative_slope=0.01,
                         tm=512, tn=1024, tk=1024, out_dtype=jnp.bfloat16):
    """Inference-mode LinearBlock forward.

    x:       (N, in_features)
    w_p, scale_p, shift_p: padded params from prepare_linear_block_params
    """
    # Eval-mode dropout is the identity (matches module.eval()).
    # TODO(synk): training-mode dropout (random mask * 1/(1-p)) not implemented.
    del dropout
    if activation not in ("relu", "leaky_relu", "tanh", "none"):
        raise ValueError(f"unknown activation: {activation}")

    N, in_features = x.shape
    k_p, n_p = w_p.shape
    if out_features is None:
        out_features = n_p
    assert in_features <= k_p and out_features <= n_p

    # ---- tile selection --------------------------------------------------
    tk = _pick_tile(k_p, tk, 128)
    tn = _pick_tile(n_p, tn, 128)
    m_p = _round_up(N, 16)                 # bf16 sublane packing -> 16-row align
    if m_p <= 1024:
        tm = m_p                           # single M tile: weights streamed once
    else:
        tm = _round_up(min(tm, m_p), 16)
        m_p = _round_up(N, tm)

    # v7x megacore: keep >= 2 points on the parallel (M x N) sub-grid when the
    # problem is big enough that splitting is worth the extra grid step.
    if (m_p // tm) * (n_p // tn) == 1:
        if n_p >= 512 and (n_p // 128) % 2 == 0:
            tn = n_p // 2
        elif m_p >= 256 and m_p % 32 == 0:
            tm = m_p // 2

    grid = (m_p // tm, n_p // tn, k_p // tk)

    # ---- pad x only when needed (aligned case is a pure dtype cast) -------
    if (N, in_features) == (m_p, k_p):
        x_p = x.astype(jnp.bfloat16)
    else:
        x_p = jnp.zeros((m_p, k_p), jnp.bfloat16).at[:N, :in_features].set(
            x.astype(jnp.bfloat16))

    out_bytes = jnp.dtype(out_dtype).itemsize
    # Double-buffered VMEM footprint -> explicit scoped-VMEM limit
    # (v5e default is 16 MiB; keep the limit well under v7x's 64 MiB physical).
    vmem_bytes = (2 * tm * tk * 2          # x tiles (bf16)
                  + 2 * tk * tn * 2        # weight tiles (bf16)
                  + 2 * tm * tn * out_bytes  # out tiles
                  + tm * tn * 4            # f32 accumulator
                  + 4 * tn * 4 * 2)        # scale/shift tiles
    vmem_limit = int(min(max(32 << 20, 2 * vmem_bytes), 48 << 20))

    cost = pl.CostEstimate(
        flops=2 * m_p * n_p * k_p + 2 * m_p * n_p,
        transcendentals=m_p * n_p if activation == "tanh" else 0,
        bytes_accessed=(m_p * k_p * 2
                        + (m_p // tm) * k_p * n_p * 2
                        + m_p * n_p * out_bytes),
    )

    kernel = functools.partial(_linear_block_kernel,
                               activation=activation,
                               negative_slope=negative_slope)

    out_p = pl.pallas_call(
        kernel,
        out_shape=jax.ShapeDtypeStruct((m_p, n_p), out_dtype),
        grid_spec=pltpu.PrefetchScalarGridSpec(
            num_scalar_prefetch=0,
            grid=grid,
            in_specs=[
                pl.BlockSpec((tm, tk), lambda i, j, k: (i, k)),   # x tile
                pl.BlockSpec((tk, tn), lambda i, j, k: (k, j)),   # weight tile
                pl.BlockSpec((1, tn), lambda i, j, k: (0, j)),    # BN scale
                pl.BlockSpec((1, tn), lambda i, j, k: (0, j)),    # folded shift
            ],
            out_specs=pl.BlockSpec((tm, tn), lambda i, j, k: (i, j)),
            scratch_shapes=[pltpu.VMEM((tm, tn), jnp.float32)],
        ),
        compiler_params=pltpu.CompilerParams(
            dimension_semantics=("parallel", "parallel", "arbitrary"),
            vmem_limit_bytes=vmem_limit),
        cost_estimate=cost,
    )(x_p, w_p, scale_p, shift_p)

    if (m_p, n_p) == (N, out_features):
        return out_p
    return out_p[:N, :out_features]


def _reference(x, weight, bias, gamma, beta, mean, var,
               *, activation, eps=1e-5, negative_slope=0.01):
    z = x @ weight.T + bias
    z = (z - mean) / jnp.sqrt(var + eps) * gamma + beta
    if activation == "relu":
        return jnp.maximum(z, 0.0)
    if activation == "leaky_relu":
        return jnp.where(z >= 0.0, z, z * negative_slope)
    if activation == "tanh":
        return jnp.tanh(z)
    return z


if __name__ == "__main__":
    key = jax.random.PRNGKey(0)
    N, in_features, out_features = 8, 32, 64
    activation = "leaky_relu"

    k = jax.random.split(key, 7)
    x = jax.random.normal(k[0], (N, in_features), dtype=jnp.float32)
    # Deterministic parameter init (Linear: uniform(-1/sqrt(in), 1/sqrt(in)))
    bound = 1.0 / jnp.sqrt(float(in_features))
    weight = jax.random.uniform(k[1], (out_features, in_features),
                                minval=-bound, maxval=bound, dtype=jnp.float32)
    bias = jax.random.uniform(k[2], (out_features,),
                              minval=-bound, maxval=bound, dtype=jnp.float32)
    gamma = 1.0 + 0.1 * jax.random.normal(k[3], (out_features,), dtype=jnp.float32)
    beta = 0.1 * jax.random.normal(k[4], (out_features,), dtype=jnp.float32)
    running_mean = 0.1 * jax.random.normal(k[5], (out_features,), dtype=jnp.float32)
    running_var = jnp.abs(1.0 + 0.1 * jax.random.normal(k[6], (out_features,),
                                                        dtype=jnp.float32))

    # One-time parameter folding + padding (cache/reuse across calls).
    w_p, scale_p, shift_p, out_f = prepare_linear_block_params(
        weight, bias, gamma, beta, running_mean, running_var)

    out = linear_block_forward(x, w_p, scale_p, shift_p, out_f,
                               activation=activation, dropout=0.2)
    out = jax.block_until_ready(out)

    ref = _reference(x, weight, bias, gamma, beta, running_mean, running_var,
                     activation=activation)
    assert out.shape == (N, out_features)
    # bf16 matmul inputs / bf16 output -> relaxed tolerance vs the f32 reference.
    assert jnp.allclose(out.astype(jnp.float32), ref,
                        atol=5e-2, rtol=5e-2), "mismatch vs reference"

    print("KERNEL_OK")
</pallas_src>

<mosaic_0001>
module attributes {stable_mosaic.version = 11 : i64} {
  func.func @_linear_block_kernel(%arg0: i32, %arg1: i32, %arg2: i32, %arg3: memref<16x128xbf16, #tpu.memory_space<vmem>>, %arg4: memref<128x128xbf16, #tpu.memory_space<vmem>>, %arg5: memref<1x128xf32, #tpu.memory_space<vmem>>, %arg6: memref<1x128xf32, #tpu.memory_space<vmem>>, %arg7: memref<16x128xbf16, #tpu.memory_space<vmem>>, %arg8: memref<16x128xf32, #tpu.memory_space<vmem>>) attributes {dimension_semantics = [#tpu.dimension_semantics<parallel>, #tpu.dimension_semantics<parallel>, #tpu.dimension_semantics<arbitrary>], iteration_bounds = array<i64: 1, 1, 1>, scalar_prefetch = 0 : i64, scratch_operands = 1 : i64, tpu.core_type = #tpu.core_type<tc>, window_params = [{transform_indices = @transform_0, window_bounds = array<i64: 16, 128>}, {transform_indices = @transform_1, window_bounds = array<i64: 128, 128>}, {transform_indices = @transform_2, window_bounds = array<i64: 1, 128>}, {transform_indices = @transform_3, window_bounds = array<i64: 1, 128>}, {transform_indices = @transform_4, window_bounds = array<i64: 16, 128>}]} {
    %c0_i32 = arith.constant 0 : i32
    %0 = arith.cmpi eq, %arg2, %c0_i32 : i32
    %1 = arith.extui %0 : i1 to i32
    %c0_i32_0 = arith.constant 0 : i32
    %2 = arith.cmpi ne, %1, %c0_i32_0 : i32
    scf.if %2 {
      %cst_10 = arith.constant 0.000000e+00 : f32
      %12 = vector.broadcast %cst_10 : f32 to vector<16x128xf32>
      %c0_11 = arith.constant 0 : index
      %c0_12 = arith.constant 0 : index
      %13 = vector.load %arg8[%c0_11, %c0_12] : memref<16x128xf32, #tpu.memory_space<vmem>>, vector<16x128xf32>
      tpu.vector_store %arg8[%c0_11, %c0_12], %12 {strides = array<i32>} : memref<16x128xf32, #tpu.memory_space<vmem>>, vector<16x128xf32>,
    } else {
    }
    %c0 = arith.constant 0 : index
    %c0_1 = arith.constant 0 : index
    %3 = vector.load %arg8[%c0, %c0_1] : memref<16x128xf32, #tpu.memory_space<vmem>>, vector<16x128xf32>
    %c0_2 = arith.constant 0 : index
    %c0_3 = arith.constant 0 : index
    %4 = vector.load %arg3[%c0_2, %c0_3] : memref<16x128xbf16, #tpu.memory_space<vmem>>, vector<16x128xbf16>
    %c0_4 = arith.constant 0 : index
    %c0_5 = arith.constant 0 : index
    %5 = vector.load %arg4[%c0_4, %c0_5] : memref<128x128xbf16, #tpu.memory_space<vmem>>, vector<128x128xbf16>
    %cst = arith.constant dense<0.000000e+00> : vector<16x128xf32>
    %6 = tpu.matmul %4, %5, %cst {dimension_numbers = #tpu.dot_dimension_numbers<[1], [0], [0], [1], [0, 0, 1, 1], [], []>} : vector<16x128xbf16>, vector<128x128xbf16>, vector<16x128xf32> -> vector<16x128xf32>
    %7 = arith.addf %3, %6 : vector<16x128xf32>
    %c0_6 = arith.constant 0 : index
    %c0_7 = arith.constant 0 : index
    %8 = vector.load %arg8[%c0_6, %c0_7] : memref<16x128xf32, #tpu.memory_space<vmem>>, vector<16x128xf32>
    tpu.vector_store %arg8[%c0_6, %c0_7], %7 {strides = array<i32>} : memref<16x128xf32, #tpu.memory_space<vmem>>, vector<16x128xf32>,
    %c0_i32_8 = arith.constant 0 : i32
    %9 = arith.cmpi eq, %arg2, %c0_i32_8 : i32
    %10 = arith.extui %9 : i1 to i32
    %c0_i32_9 = arith.constant 0 : i32
    %11 = arith.cmpi ne, %10, %c0_i32_9 : i32
    scf.if %11 {
      %c0_10 = arith.constant 0 : index
      %c0_11 = arith.constant 0 : index
      %12 = vector.load %arg8[%c0_10, %c0_11] : memref<16x128xf32, #tpu.memory_space<vmem>>, vector<16x128xf32>
      %c0_12 = arith.constant 0 : index
      %c0_13 = arith.constant 0 : index
      %13 = vector.load %arg5[%c0_12, %c0_13] : memref<1x128xf32, #tpu.memory_space<vmem>>, vector<1x128xf32>
      %14 = vector.broadcast %13 : vector<1x128xf32> to vector<16x128xf32>
      %15 = arith.mulf %12, %14 : vector<16x128xf32>
      %c0_14 = arith.constant 0 : index
      %c0_15 = arith.constant 0 : index
      %16 = vector.load %arg6[%c0_14, %c0_15] : memref<1x128xf32, #tpu.memory_space<vmem>>, vector<1x128xf32>
      %17 = vector.broadcast %16 : vector<1x128xf32> to vector<16x128xf32>
      %18 = arith.addf %15, %17 : vector<16x128xf32>
      %cst_16 = arith.constant 0.000000e+00 : f32
      %19 = vector.broadcast %cst_16 : f32 to vector<16x128xf32>
      %20 = arith.cmpf oge, %18, %19 : vector<16x128xf32>
      %cst_17 = arith.constant 0.00999999977 : f32
      %21 = vector.broadcast %cst_17 : f32 to vector<16x128xf32>
      %22 = arith.mulf %18, %21 : vector<16x128xf32>
      %23 = arith.select %20, %18, %22 : vector<16x128xi1>, vector<16x128xf32>
      %24 = arith.truncf %23 : vector<16x128xf32> to vector<16x128xbf16>
      %c0_18 = arith.constant 0 : index
      %c0_19 = arith.constant 0 : index
      %25 = vector.load %arg7[%c0_18, %c0_19] : memref<16x128xbf16, #tpu.memory_space<vmem>>, vector<16x128xbf16>
      tpu.vector_store %arg7[%c0_18, %c0_19], %24 {strides = array<i32>} : memref<16x128xbf16, #tpu.memory_space<vmem>>, vector<16x128xbf16>,
    } else {
    }
    return
  }
  func.func @transform_0(%arg0: i32, %arg1: i32, %arg2: i32) -> (i32, i32) {
    %c0_i32 = arith.constant 0 : i32
    return %arg0, %arg2 : i32, i32
  }
  func.func @transform_1(%arg0: i32, %arg1: i32, %arg2: i32) -> (i32, i32) {
    %c0_i32 = arith.constant 0 : i32
    return %arg2, %arg1 : i32, i32
  }
  func.func @transform_2(%arg0: i32, %arg1: i32, %arg2: i32) -> (i32, i32) {
    %c0_i32 = arith.constant 0 : i32
    %c0_i32_0 = arith.constant 0 : i32
    return %c0_i32, %arg1 : i32, i32
  }
  func.func @transform_3(%arg0: i32, %arg1: i32, %arg2: i32) -> (i32, i32) {
    %c0_i32 = arith.constant 0 : i32
    %c0_i32_0 = arith.constant 0 : i32
    return %c0_i32, %arg1 : i32, i32
  }
  func.func @transform_4(%arg0: i32, %arg1: i32, %arg2: i32) -> (i32, i32) {
    %c0_i32 = arith.constant 0 : i32
    return %arg0, %arg1 : i32, i32
  }
}

</mosaic_0001>

<llo_original>
// kernel: tpu_custom_call.1
$region0: #{tpu_custom_call.1}
  #allocation0 [shape = 'u32[]', space=smem, size = 0x4, offset = 0x4, fixed_abs, tag = 'smem constant byte address 0x4 - core index']
  #allocation1 [shape = 'u32[144,128]{1,0:T(1,128)}', space=vmem, size = 0x12000, scoped, tag = 'internal scratch']
  #allocation2 [shape = 'f32[16,128]{1,0:T(8,128)}', space=vmem, size = 0x2000, scoped, tag = 'scratch operand']
  %s0 = inlined_call_operand.hbm [shape: bf16[16,128], index: 0, kind: input, shape index: {}]
  %s1 = inlined_call_operand.hbm [shape: bf16[128,128], index: 1, kind: input, shape index: {}]
  %s2 = inlined_call_operand.vmem [shape: f32[1,128], index: 2, kind: input, shape index: {}]
  %s3 = inlined_call_operand.vmem [shape: f32[1,128], index: 3, kind: input, shape index: {}]
  %s4 = inlined_call_operand.hbm [shape: bf16[16,128], index: 4, kind: output, shape index: {}]
  %s5 = sld [smem:[#allocation0]]
  $region42: #{tpu_custom_call.1} parent=0
    _
  %s7 = ssub.s32 1, %s5
  %s8 = scalar_select 0, %s7, %s5
  $region1: #{tpu_custom_call.1} parent=0
    #allocation3 [shape = 'u8[4096]{0}', space=vmem, size = 0x1000, scoped, tag = 'input window, operand 0, single buffered']
    #allocation4 [shape = 's32[1]{0}', space=sflag, size = 0x4, scoped, tag = 'scoped memory for tpu_custom_call.1']
    #allocation5 [shape = 's32[1]{0}', space=sflag, size = 0x4, scoped, tag = 'scoped memory for tpu_custom_call.1']
    #allocation6 [shape = 'u8[32768]{0}', space=vmem, size = 0x8000, scoped, tag = 'input window, operand 1, single buffered']
    #allocation7 [shape = 's32[1]{0}', space=sflag, size = 0x4, scoped, tag = 'scoped memory for tpu_custom_call.1']
    #allocation8 [shape = 'u8[4096]{0}', space=vmem, size = 0x1000, scoped, tag = 'output window, operand 0, single buffered']
    %9 = vsyncpa [#allocation4], 0
    %10 = vsyncpa [#allocation7], 0
    %11 = vsyncpa [#allocation5], 0
    // Predicated region
    $region2: #{tpu_custom_call.1} parent=1 // pred_check
      _
    $region3: #{tpu_custom_call.1} parent=1 // pred_check_branch
      %13 = sbr.rel (0) target = $region5
    $region4: #{tpu_custom_call.1} parent=1 // pred_region
      %s15 = ssub.s32 128, 128
      %16 = vsyncadd [#allocation4], %s15
      %s17 = sshll.u32 [#allocation3], 4
      %s18 = int_to_ptr.vmem [resolvable:$true] %s17
      %23 = dma.hbm_to_vmem [thread:$0]  %s0, 128, %s18, [#allocation4], 64, 64, 4
    $region5: #{tpu_custom_call.1} parent=1 // pred_fallthru
      _
    // Predicated region
    $region6: #{tpu_custom_call.1} parent=1 // pred_check
      _
    $region7: #{tpu_custom_call.1} parent=1 // pred_check_branch
      %25 = sbr.rel (0) target = $region9
    $region8: #{tpu_custom_call.1} parent=1 // pred_region
      %s27 = ssub.s32 1024, 1024
      %28 = vsyncadd [#allocation7], %s27
      %s29 = sshll.u32 [#allocation6], 4
      %s30 = int_to_ptr.vmem [resolvable:$true] %s29
      %35 = dma.hbm_to_vmem [thread:$0]  %s1, 1024, %s30, [#allocation7], 64, 64, 4
    $region9: #{tpu_custom_call.1} parent=1 // pred_fallthru
      _
    // Predicated region
    $region10: #{tpu_custom_call.1} parent=1 // pred_check
      _
    $region11: #{tpu_custom_call.1} parent=1 // pred_check_branch
      %37 = sbr.rel (0) target = $region13
    $region12: #{tpu_custom_call.1} parent=1 // pred_region
      _
    $region13: #{tpu_custom_call.1} parent=1 // pred_fallthru
      _
    // Predicated region
    $region14: #{tpu_custom_call.1} parent=1 // pred_check
      _
    $region15: #{tpu_custom_call.1} parent=1 // pred_check_branch
      %39 = sbr.rel (0) target = $region17
    $region16: #{tpu_custom_call.1} parent=1 // pred_region
      _
    $region17: #{tpu_custom_call.1} parent=1 // pred_fallthru
      _
    // Predicated region
    $region18: #{tpu_custom_call.1} parent=1 // pred_check
      _
    $region19: #{tpu_custom_call.1} parent=1 // pred_check_branch
      %41 = sbr.rel (0) target = $region21
    $region20: #{tpu_custom_call.1} parent=1 // pred_region
      %42 = dma.done [#allocation4], 128
    $region21: #{tpu_custom_call.1} parent=1 // pred_fallthru
      _
    // Predicated region
    $region22: #{tpu_custom_call.1} parent=1 // pred_check
      _
    $region23: #{tpu_custom_call.1} parent=1 // pred_check_branch
      %44 = sbr.rel (0) target = $region25
    $region24: #{tpu_custom_call.1} parent=1 // pred_region
      %45 = dma.done [#allocation7], 1024
    $region25: #{tpu_custom_call.1} parent=1 // pred_fallthru
      _
    %p47 = scmp.eq.s32.totalorder 0, 0
    // Predicated region
    $region26: #{tpu_custom_call.1} parent=1 // pred_check
      %p48 = pneg %p47
    $region27: #{tpu_custom_call.1} parent=1 // pred_check_branch
      %50 = sbr.rel (%p48) target = $region29
    $region28: #{tpu_custom_call.1} parent=1 // pred_region
      %51 = vst [vmem:[#allocation2] sm:$0xff] 0.0
      %52 = vst [vmem:[#allocation2 + $0x8] sm:$0xff] 0.0
    $region29: #{tpu_custom_call.1} parent=1 // pred_fallthru
      _
    %v53 = vld [vmem:[#allocation2] sm:$0xff]
    %v54 = vld [vmem:[#allocation2 + $0x8] sm:$0xff]
    %v55 = vld [vmem:[#allocation3] sm:$0xf]
    %v56 = vld [vmem:[#allocation3 + $0x4] sm:$0xf]
    %v57 = vld [vmem:[#allocation6] sm:$0xf]
    %v58 = vld [vmem:[#allocation6 + $0x4] sm:$0xf]
    %v59 = vld [vmem:[#allocation6 + $0x8] sm:$0xf]
    %v60 = vld [vmem:[#allocation6 + $0xc] sm:$0xf]
    %v61 = vld [vmem:[#allocation6 + $0x10] sm:$0xf]
    %v62 = vld [vmem:[#allocation6 + $0x14] sm:$0xf]
    %v63 = vld [vmem:[#allocation6 + $0x18] sm:$0xf]
    %v64 = vld [vmem:[#allocation6 + $0x1c] sm:$0xf]
    %v65 = vld [vmem:[#allocation6 + $0x20] sm:$0xf]
    %v66 = vld [vmem:[#allocation6 + $0x24] sm:$0xf]
    %v67 = vld [vmem:[#allocation6 + $0x28] sm:$0xf]
    %v68 = vld [vmem:[#allocation6 + $0x2c] sm:$0xf]
    %v69 = vld [vmem:[#allocation6 + $0x30] sm:$0xf]
    %v70 = vld [vmem:[#allocation6 + $0x34] sm:$0xf]
    %v71 = vld [vmem:[#allocation6 + $0x38] sm:$0xf]
    %v72 = vld [vmem:[#allocation6 + $0x3c] sm:$0xf]
    %v75 = vunpack.c.l.b16 %v55
    %v76 = vunpack.c.l.b16 %v56
    %v77 = vpack.c.b16 %v76, %v75
    %v95 = vunpack.c.l.b16 %v57
    %v96 = vunpack.c.l.b16 %v58
    %v97 = vunpack.c.l.b16 %v59
    %v98 = vunpack.c.l.b16 %v60
    %v99 = vunpack.c.l.b16 %v61
    %v100 = vunpack.c.l.b16 %v62
    %v101 = vunpack.c.l.b16 %v63
    %v102 = vunpack.c.l.b16 %v64
    %v103 = vunpack.c.l.b16 %v65
    %v104 = vunpack.c.l.b16 %v66
    %v105 = vunpack.c.l.b16 %v67
    %v106 = vunpack.c.l.b16 %v68
    %v107 = vunpack.c.l.b16 %v69
    %v108 = vunpack.c.l.b16 %v70
    %v109 = vunpack.c.l.b16 %v71
    %v110 = vunpack.c.l.b16 %v72
    %v111 = vpack.c.b16 %v96, %v95
    %v112 = vpack.c.b16 %v98, %v97
    %v113 = vpack.c.b16 %v100, %v99
    %v114 = vpack.c.b16 %v102, %v101
    %v115 = vpack.c.b16 %v104, %v103
    %v116 = vpack.c.b16 %v106, %v105
    %v117 = vpack.c.b16 %v108, %v107
    %v118 = vpack.c.b16 %v110, %v109
    %127 = vmatprep.subr.bf16.mxu0 0
    %128 = vmatpush1.bf16.msra.mxu0 %v111
    %129 = vmatprep.subr.bf16.mxu0 0
    %130 = vmatpush1.bf16.msra.mxu0 %v112
    %131 = vmatprep.subr.bf16.mxu0 0
    %132 = vmatpush1.bf16.msra.mxu0 %v113
    %133 = vmatprep.subr.bf16.mxu0 0
    %134 = vmatpush1.bf16.msra.mxu0 %v114
    %135 = vmatprep.subr.bf16.mxu0 0
    %136 = vmatpush1.bf16.msra.mxu0 %v115
    %137 = vmatprep.subr.bf16.mxu0 0
    %138 = vmatpush1.bf16.msra.mxu0 %v116
    %139 = vmatprep.subr.bf16.mxu0 0
    %140 = vmatpush1.bf16.msra.mxu0 %v117
    %141 = vmatprep.subr.bf16.mxu0 0
    %142 = vmatpush1.bf16.msra.mxu0 %v118
    %143 = vmatprep.subr.bf16.mxu0 0
    %144 = vmatpush1.bf16.msra.mxu0 0
    %145 = vmatprep.subr.bf16.mxu0 0
    %146 = vmatpush1.bf16.msra.mxu0 0
    %147 = vmatprep.subr.bf16.mxu0 0
    %148 = vmatpush1.bf16.msra.mxu0 0
    %149 = vmatprep.subr.bf16.mxu0 0
    %150 = vmatpush1.bf16.msra.mxu0 0
    %151 = vmatprep.subr.bf16.mxu0 0
    %152 = vmatpush1.bf16.msra.mxu0 0
    %153 = vmatprep.subr.bf16.mxu0 0
    %154 = vmatpush1.bf16.msra.mxu0 0
    %155 = vmatprep.subr.bf16.mxu0 0
    %156 = vmatpush1.bf16.msra.mxu0 0
    %157 = vmatprep.subr.bf16.mxu0 0
    %158 = vmatpush1.bf16.msra.mxu0 0
    %159 = vmatprep.mubr.bf16.mxu0 0
    %160 = vmatmul.mubr.bf16.gmra.mrb[0].mxu0 %v77
    %v161 = vpop.f32.mrb[0].mxu0
    %v162 = vadd.f32 0.0, %v161
    %v163 = vpop.f32.mrb[0].mxu0
    %v164 = vpop.f32.mrb[0].mxu0
    %v165 = vadd.f32 0.0, %v164
    %v166 = vpop.f32.mrb[0].mxu0
    %167 = vdwg.mxu0
    %v168 = vadd.f32 %v53, %v162
    %v169 = vadd.f32 %v54, %v165
    %170 = vst [vmem:[#allocation2] sm:$0xff] %v168
    %171 = vst [vmem:[#allocation2 + $0x8] sm:$0xff] %v169
    // Predicated region
    $region30: #{tpu_custom_call.1} parent=1 // pred_check
      %p172 = pneg %p47
    $region31: #{tpu_custom_call.1} parent=1 // pred_check_branch
      %174 = sbr.rel (%p172) target = $region33
    $region32: #{tpu_custom_call.1} parent=1 // pred_region
      %v175 = vld [vmem:[#allocation2] sm:$0xff]
      %v176 = vld [vmem:[#allocation2 + $0x8] sm:$0xff]
      %v177 = vld [vmem:[%s2] sm:$0x1]
      %v179 = vlaneseq
      %v180 = vshrl.u32 %v179, 7
      %v181 = vsub.s32 0, %v180
      %v182 = vrot.slane %v177, %v181
      %v184 = vmul.f32 %v175, %v182
      %v185 = vmul.f32 %v176, %v182
      %v186 = vld [vmem:[%s3] sm:$0x1]
      %v188 = vlaneseq
      %v189 = vshrl.u32 %v188, 7
      %v190 = vsub.s32 0, %v189
      %v191 = vrot.slane %v186, %v190
      %v193 = vadd.f32 %v184, %v191
      %v194 = vadd.f32 %v185, %v191
      %vm195 = vcmp.ge.f32.partialorder %v193, 0.0
      %vm196 = vcmp.ge.f32.partialorder %v194, 0.0
      %v197 = vmul.f32 %v193, 0.01
      %v198 = vmul.f32 %v194, 0.01
      %v199 = vsel %vm195, %v193, %v197
      %v200 = vsel %vm196, %v194, %v198
      %v201 = vpack.c.bf16 %v200, %v199
      %v203 = vunpack.c.l.b16 %v201
      %v204 = vunpack.c.h.b16 %v201
      %v205 = vpack.c.b16 %v203, %v203
      %v206 = vpack.c.b16 %v204, %v204
      %209 = vst [vmem:[#allocation8] sm:$0xf] %v205
      %210 = vst [vmem:[#allocation8 + $0x4] sm:$0xf] %v206
    $region33: #{tpu_custom_call.1} parent=1 // pred_fallthru
      _
    // Predicated region
    $region34: #{tpu_custom_call.1} parent=1 // pred_check
      _
    $region35: #{tpu_custom_call.1} parent=1 // pred_check_branch
      %212 = sbr.rel (0) target = $region37
    $region36: #{tpu_custom_call.1} parent=1 // pred_region
      %s214 = ssub.s32 128, 128
      %215 = vsyncadd [#allocation5], %s214
      %s216 = sshll.u32 [#allocation8], 4
      %s217 = int_to_ptr.vmem [resolvable:$true] %s216
      %222 = dma.vmem_to_hbm [thread:$0]  %s217, 128, %s4, [#allocation5], 64, 64, 4
    $region37: #{tpu_custom_call.1} parent=1 // pred_fallthru
      _
    // Predicated region
    $region38: #{tpu_custom_call.1} parent=1 // pred_check
      _
    $region39: #{tpu_custom_call.1} parent=1 // pred_check_branch
      %224 = sbr.rel (0) target = $region41
    $region40: #{tpu_custom_call.1} parent=1 // pred_region
      %225 = dma.done [#allocation5], 128
    $region41: #{tpu_custom_call.1} parent=1 // pred_fallthru
      _
    %226 = vsyncpa [#allocation4], 1
    %227 = vsyncpa [#allocation7], 1
    %228 = vsyncpa [#allocation5], 1

</llo_original>
